<compile_context>
chip_gen: v5e
topology: v5e:2x2
jax: 0.10.0
libtpu: 0.0.40
codegen_flags: <defaults>
</compile_context>

<pallas_src>
import numpy as np
import jax
import jax.numpy as jnp
from jax.experimental import pallas as pl
from jax.experimental.pallas import tpu as pltpu


def _round_up(x, m):
    return (x + m - 1) // m * m


def _cdiv(a, b):
    return (a + b - 1) // b


def ffm_kernel(ab_ref, lb_ref, out_ref):
    # ab_ref : (2, K_pad, TB) bf16  -- stacked paired field-aware embeddings
    # lb_ref : (1, TB) f32          -- precomputed linear_sum + bias
    # out_ref: (1, TB) f32          -- lane-dense sigmoid(FFM logit)
    a = ab_ref[0].astype(jnp.float32)   # upcast right after load (v5e has no bf16 VPU)
    b = ab_ref[1].astype(jnp.float32)
    s = jnp.sum(a * b, axis=0, keepdims=True)          # (1, TB) f32 accumulation
    out_ref[...] = jax.nn.sigmoid(s + lb_ref[...])


def ffm_forward(x, field_tables, linear_table, bias, feature_nums,
                compute_dtype=jnp.bfloat16, tb_cap=4096):
    """x: (B, F) int32. field_tables: (F, V, E). linear_table: (V, 1). bias: (1,)."""
    F = len(feature_nums)
    B = x.shape[0]
    E = field_tables.shape[-1]

    offsets = jnp.asarray(
        np.concatenate([[0], np.cumsum(feature_nums)[:-1]]), jnp.int32)
    idx = x.astype(jnp.int32) + offsets[None, :]            # (B, F) shared-vocab indices

    # Field pairs (i < j). PyTorch pairs embedding[:, j*F+i] with embedding[:, i*F+j],
    # i.e. (table j, field i) . (table i, field j).
    pi, pj = [], []
    for i in range(F):
        for j in range(i + 1, F):
            pi.append(i)
            pj.append(j)
    pi = jnp.asarray(pi, jnp.int32)
    pj = jnp.asarray(pj, jnp.int32)
    P = int(pi.shape[0])
    K = P * E
    K_pad = _round_up(K, 16)          # bf16 sublane packing; zero pad contributes 0

    # Adaptive batch tiling: lane axis multiple of 128, padding kept small, and >= 2
    # grid steps for larger batches so the "parallel" axis shards across both v7x TCs.
    n_tiles = _cdiv(B, tb_cap)
    if B > 256:
        n_tiles = max(n_tiles, 2)
    TB = _round_up(max(_cdiv(B, n_tiles), 1), 128)
    B_pad = _round_up(B, TB)

    # bf16 glue: cast tables before the gather so the wrapper moves bf16, not f32.
    tables_c = field_tables.astype(compute_dtype)
    A = tables_c[pj[None, :], idx[:, pi], :]                # (B, P, E) table j, field i
    Bm = tables_c[pi[None, :], idx[:, pj], :]               # (B, P, E) table i, field j

    ab = jnp.stack([A.reshape(B, K), Bm.reshape(B, K)], axis=0)      # (2, B, K) bf16
    ab = jnp.pad(ab, ((0, 0), (0, B_pad - B), (0, K_pad - K)))
    ab_t = jnp.transpose(ab, (0, 2, 1))                     # (2, K_pad, B_pad), batch on lanes

    # Linear term + bias computed once in the wrapper (tiny f32 stream, not folded
    # into the dominant operand stream).
    lin_sum = linear_table[idx, 0].astype(jnp.float32).sum(axis=1)   # (B,)
    lin_sum = lin_sum + bias.astype(jnp.float32)[0]
    lb = jnp.pad(lin_sum, (0, B_pad - B)).reshape(1, B_pad)          # (1, B_pad) f32

    grid = (B_pad // TB,)
    itemsize = jnp.dtype(compute_dtype).itemsize
    ab_block = 2 * K_pad * TB * itemsize                    # stacked bf16 operand block
    small_blocks = 2 * TB * 4                               # lin block + out block
    f32_temps = 3 * K_pad * TB * 4                          # in-kernel upcasts + product
    tile_bytes = 2 * (ab_block + small_blocks) + f32_temps  # x2 = double buffering
    # Keep headroom; stay well below the v7x 64 MiB physical per-TC VMEM.
    vmem_limit = int(min(48 << 20, max(32 << 20, 2 * tile_bytes)))

    out = pl.pallas_call(
        ffm_kernel,
        out_shape=jax.ShapeDtypeStruct((1, B_pad), jnp.float32),
        grid=grid,
        in_specs=[
            pl.BlockSpec((2, K_pad, TB), lambda i: (0, 0, i)),
            pl.BlockSpec((1, TB), lambda i: (0, i)),
        ],
        out_specs=pl.BlockSpec((1, TB), lambda i: (0, i)),
        compiler_params=pltpu.CompilerParams(
            dimension_semantics=("parallel",),
            vmem_limit_bytes=vmem_limit,
        ),
    )(ab_t, lb)

    return out[0, :B].reshape(B, 1)


def ffm_reference(x, field_tables, linear_table, bias, feature_nums):
    """Pure-JAX f32 mirror of the PyTorch forward (for correctness check)."""
    F = len(feature_nums)
    offsets = jnp.asarray(
        np.concatenate([[0], np.cumsum(feature_nums)[:-1]]), jnp.int32)
    idx = x + offsets[None, :]
    embs = [field_tables[t][idx] for t in range(F)]         # each (B, F, E)
    embedding = jnp.concatenate(embs, axis=1)               # (B, F*F, E)
    i_list, j_list = [], []
    for i in range(F):
        for j in range(i + 1, F):
            i_list.append(j * F + i)
            j_list.append(i * F + j)
    interaction = (embedding[:, jnp.asarray(i_list)] *
                   embedding[:, jnp.asarray(j_list)]).sum(axis=2).sum(axis=1)[:, None]
    lin = linear_table[idx].sum(axis=1)                     # (B, 1)
    return jax.nn.sigmoid(lin + bias + interaction)


if __name__ == "__main__":
    # Small synthetic configuration consistent with the module:
    feature_nums = [3, 4, 5, 6]   # F = 4 categorical fields
    F = len(feature_nums)
    V = sum(feature_nums)         # shared vocab size = 18
    E = 8                         # embedding dim
    B = 8                         # batch

    key = jax.random.PRNGKey(0)
    k_tab, k_lin, kx = jax.random.split(key, 3)

    # Deterministic parameter init (synthetic; mirrors nn.Embedding shapes).
    field_tables = 0.1 * jax.random.normal(k_tab, (F, V, E), dtype=jnp.float32)
    linear_table = 0.1 * jax.random.normal(k_lin, (V, 1), dtype=jnp.float32)
    bias = jnp.zeros((1,), dtype=jnp.float32)

    # Integer inputs: x[b, f] in [0, feature_nums[f])
    cols = []
    for f in range(F):
        kx, kc = jax.random.split(kx)
        cols.append(jax.random.randint(kc, (B, 1), 0, feature_nums[f], dtype=jnp.int32))
    x = jnp.concatenate(cols, axis=1)            # (B, F) int32

    out = ffm_forward(x, field_tables, linear_table, bias, feature_nums)
    out = jax.block_until_ready(out)

    ref = ffm_reference(x, field_tables, linear_table, bias, feature_nums)
    assert out.shape == (B, 1)
    # bf16 streaming of the embeddings => compare against the f32 reference with a
    # bf16-appropriate tolerance.
    assert jnp.allclose(out, ref, rtol=1e-2, atol=5e-3), (out, ref)

    print("KERNEL_OK")
</pallas_src>

<mosaic_0001>
module attributes {stable_mosaic.version = 11 : i64} {
  func.func @ffm_kernel(%arg0: i32, %arg1: memref<2x48x128xbf16, #tpu.memory_space<vmem>>, %arg2: memref<1x128xf32, #tpu.memory_space<vmem>>, %arg3: memref<1x128xf32, #tpu.memory_space<vmem>>) attributes {dimension_semantics = [#tpu.dimension_semantics<parallel>], iteration_bounds = array<i64: 1>, scalar_prefetch = 0 : i64, scratch_operands = 0 : i64, tpu.core_type = #tpu.core_type<tc>, window_params = [{transform_indices = @transform_0, window_bounds = array<i64: 2, 48, 128>}, {transform_indices = @transform_1, window_bounds = array<i64: 1, 128>}, {transform_indices = @transform_2, window_bounds = array<i64: 1, 128>}]} {
    %c0 = arith.constant 0 : index
    %c0_0 = arith.constant 0 : index
    %c0_1 = arith.constant 0 : index
    %0 = vector.load %arg1[%c0, %c0_0, %c0_1] : memref<2x48x128xbf16, #tpu.memory_space<vmem>>, vector<1x48x128xbf16>
    %1 = vector.shape_cast %0 : vector<1x48x128xbf16> to vector<48x128xbf16>
    %2 = arith.extf %1 : vector<48x128xbf16> to vector<48x128xf32>
    %c1 = arith.constant 1 : index
    %c0_2 = arith.constant 0 : index
    %c0_3 = arith.constant 0 : index
    %3 = vector.load %arg1[%c1, %c0_2, %c0_3] : memref<2x48x128xbf16, #tpu.memory_space<vmem>>, vector<1x48x128xbf16>
    %4 = vector.shape_cast %3 : vector<1x48x128xbf16> to vector<48x128xbf16>
    %5 = arith.extf %4 : vector<48x128xbf16> to vector<48x128xf32>
    %6 = arith.mulf %2, %5 : vector<48x128xf32>
    %cst = arith.constant dense<0.000000e+00> : vector<128xf32>
    %7 = vector.multi_reduction <add>, %6, %cst [0] : vector<48x128xf32> to vector<128xf32>
    %8 = vector.shape_cast %7 : vector<128xf32> to vector<1x128xf32>
    %c0_4 = arith.constant 0 : index
    %c0_5 = arith.constant 0 : index
    %9 = vector.load %arg2[%c0_4, %c0_5] : memref<1x128xf32, #tpu.memory_space<vmem>>, vector<1x128xf32>
    %10 = arith.addf %8, %9 : vector<1x128xf32>
    %11 = arith.negf %10 : vector<1x128xf32>
    %12 = math.exp %11 : vector<1x128xf32>
    %cst_6 = arith.constant 1.000000e+00 : f32
    %13 = vector.broadcast %cst_6 : f32 to vector<1x128xf32>
    %14 = arith.addf %13, %12 : vector<1x128xf32>
    %15 = arith.divf %13, %14 : vector<1x128xf32>
    %c0_7 = arith.constant 0 : index
    %c0_8 = arith.constant 0 : index
    %16 = vector.load %arg3[%c0_7, %c0_8] : memref<1x128xf32, #tpu.memory_space<vmem>>, vector<1x128xf32>
    tpu.vector_store %arg3[%c0_7, %c0_8], %15 {strides = array<i32>} : memref<1x128xf32, #tpu.memory_space<vmem>>, vector<1x128xf32>,
    return
  }
  func.func @transform_0(%arg0: i32) -> (i32, i32, i32) {
    %c0_i32 = arith.constant 0 : i32
    %c0_i32_0 = arith.constant 0 : i32
    %c0_i32_1 = arith.constant 0 : i32
    return %c0_i32, %c0_i32_0, %arg0 : i32, i32, i32
  }
  func.func @transform_1(%arg0: i32) -> (i32, i32) {
    %c0_i32 = arith.constant 0 : i32
    %c0_i32_0 = arith.constant 0 : i32
    return %c0_i32, %arg0 : i32, i32
  }
  func.func @transform_2(%arg0: i32) -> (i32, i32) {
    %c0_i32 = arith.constant 0 : i32
    %c0_i32_0 = arith.constant 0 : i32
    return %c0_i32, %arg0 : i32, i32
  }
}

</mosaic_0001>

<llo_original>
// kernel: tpu_custom_call.1
$region0: #{tpu_custom_call.1}
  #allocation0 [shape = 'u32[]', space=smem, size = 0x4, offset = 0x4, fixed_abs, tag = 'smem constant byte address 0x4 - core index']
  #allocation1 [shape = 'u32[72,128]{1,0:T(1,128)}', space=vmem, size = 0x9000, scoped, tag = 'internal scratch']
  %s0 = inlined_call_operand.hbm [shape: bf16[2,48,128], index: 0, kind: input, shape index: {}]
  %s1 = inlined_call_operand.hbm [shape: f32[1,128], index: 1, kind: input, shape index: {}]
  %s2 = inlined_call_operand.hbm [shape: f32[1,128], index: 2, kind: output, shape index: {}]
  %s3 = sld [smem:[#allocation0]]
  $region26: #{tpu_custom_call.1} parent=0
    _
  %s5 = ssub.s32 1, %s3
  %s6 = scalar_select 0, %s5, %s3
  $region1: #{tpu_custom_call.1} parent=0
    #allocation2 [shape = 'u8[24576]{0}', space=vmem, size = 0x6000, scoped, tag = 'input window, operand 0, single buffered']
    #allocation3 [shape = 's32[1]{0}', space=sflag, size = 0x4, scoped, tag = 'scoped memory for tpu_custom_call.1']
    #allocation4 [shape = 's32[1]{0}', space=sflag, size = 0x4, scoped, tag = 'scoped memory for tpu_custom_call.1']
    #allocation5 [shape = 'u8[512]{0}', space=vmem, size = 0x400, scoped, tag = 'input window, operand 1, single buffered']
    #allocation6 [shape = 's32[1]{0}', space=sflag, size = 0x4, scoped, tag = 'scoped memory for tpu_custom_call.1']
    #allocation7 [shape = 'u8[512]{0}', space=vmem, size = 0x400, scoped, tag = 'output window, operand 0, single buffered']
    %7 = vsyncpa [#allocation3], 0
    %8 = vsyncpa [#allocation6], 0
    %9 = vsyncpa [#allocation4], 0
    // Predicated region
    $region2: #{tpu_custom_call.1} parent=1 // pred_check
      _
    $region3: #{tpu_custom_call.1} parent=1 // pred_check_branch
      %11 = sbr.rel (0) target = $region5
    $region4: #{tpu_custom_call.1} parent=1 // pred_region
      %13 = vsyncadd [#allocation3], 0
      %s14 = sshll.u32 %s0, 4
      %s15 = int_to_ptr.hbm [resolvable:$true] %s14
      %s16 = sshll.u32 [#allocation2], 4
      %s17 = int_to_ptr.vmem [resolvable:$true] %s16
      %22 = dma.hbm_to_vmem [thread:$0]  %s15, 768, %s17, [#allocation3], 64, 64, 4
    $region5: #{tpu_custom_call.1} parent=1 // pred_fallthru
      _
    // Predicated region
    $region6: #{tpu_custom_call.1} parent=1 // pred_check
      _
    $region7: #{tpu_custom_call.1} parent=1 // pred_check_branch
      %24 = sbr.rel (0) target = $region9
    $region8: #{tpu_custom_call.1} parent=1 // pred_region
      %26 = vsyncadd [#allocation6], 0
      %s28 = sshll.u32 %s1, 4
      %s29 = int_to_ptr.hbm [resolvable:$true] %s28
      %s30 = sshll.u32 [#allocation5], 4
      %s31 = int_to_ptr.vmem [resolvable:$true] %s30
      %33 = dma.hbm_to_vmem [thread:$0]  %s29, 16, %s31, [#allocation6]
    $region9: #{tpu_custom_call.1} parent=1 // pred_fallthru
      _
    // Predicated region
    $region10: #{tpu_custom_call.1} parent=1 // pred_check
      _
    $region11: #{tpu_custom_call.1} parent=1 // pred_check_branch
      %35 = sbr.rel (0) target = $region13
    $region12: #{tpu_custom_call.1} parent=1 // pred_region
      %37 = dma.done [#allocation3], 768
    $region13: #{tpu_custom_call.1} parent=1 // pred_fallthru
      _
    // Predicated region
    $region14: #{tpu_custom_call.1} parent=1 // pred_check
      _
    $region15: #{tpu_custom_call.1} parent=1 // pred_check_branch
      %39 = sbr.rel (0) target = $region17
    $region16: #{tpu_custom_call.1} parent=1 // pred_region
      %41 = dma.done [#allocation6], 16
    $region17: #{tpu_custom_call.1} parent=1 // pred_fallthru
      _
    %v42 = vld [vmem:[#allocation2] sm:$0xf]
    %v43 = vld [vmem:[#allocation2 + $0x4] sm:$0xf]
    %v44 = vld [vmem:[#allocation2 + $0x8] sm:$0xf]
    %v45 = vld [vmem:[#allocation2 + $0xc] sm:$0xf]
    %v46 = vld [vmem:[#allocation2 + $0x10] sm:$0xf]
    %v47 = vld [vmem:[#allocation2 + $0x14] sm:$0xf]
    %v48 = vunpack.c.l.bf16 %v42
    %v49 = vunpack.c.l.bf16 %v43
    %v50 = vunpack.c.l.bf16 %v44
    %v51 = vunpack.c.l.bf16 %v45
    %v52 = vunpack.c.l.bf16 %v46
    %v53 = vunpack.c.l.bf16 %v47
    %s54 = scalar_lea.vmem [#allocation2], 24
    %v55 = vld [vmem:[%s54] sm:$0xf]
    %v56 = vld [vmem:[%s54 + $0x4] sm:$0xf]
    %v57 = vld [vmem:[%s54 + $0x8] sm:$0xf]
    %v58 = vld [vmem:[%s54 + $0xc] sm:$0xf]
    %v59 = vld [vmem:[%s54 + $0x10] sm:$0xf]
    %v60 = vld [vmem:[%s54 + $0x14] sm:$0xf]
    %v61 = vunpack.c.l.bf16 %v55
    %v62 = vunpack.c.l.bf16 %v56
    %v63 = vunpack.c.l.bf16 %v57
    %v64 = vunpack.c.l.bf16 %v58
    %v65 = vunpack.c.l.bf16 %v59
    %v66 = vunpack.c.l.bf16 %v60
    %v67 = vmul.f32 %v48, %v61
    %v68 = vmul.f32 %v49, %v62
    %v69 = vmul.f32 %v50, %v63
    %v70 = vmul.f32 %v51, %v64
    %v71 = vmul.f32 %v52, %v65
    %v72 = vmul.f32 %v53, %v66
    %v73 = vadd.f32 %v67, %v68
    %v74 = vadd.f32 %v73, %v69
    %v75 = vadd.f32 %v74, %v70
    %v76 = vadd.f32 %v75, %v71
    %v77 = vadd.f32 %v76, %v72
    %v78 = vrot.slane %v77, 4
    %v79 = vadd.f32 %v77, %v78
    %v80 = vrot.slane %v79, 2
    %v81 = vadd.f32 %v79, %v80
    %v82 = vrot.slane %v81, 1
    %v83 = vadd.f32 %v81, %v82
    %v84 = vld [vmem:[#allocation5] sm:$0x1]
    %v85 = vadd.f32 %v83, %v84
    %v86 = vxor.u32 %v85, 2147483648
    %v87 = vmul.f32 %v86, 1.442695
    %v88 = vpow.pop %v87
    %v89 = vadd.f32 %v88, 1.0
    %v90 = vrcp.pop %v89
    %v91 = vmul.f32 %v89, %v90
    %v92 = vsub.f32 1.0, %v91
    %v93 = vmul.f32 %v90, %v92
    %v94 = vadd.f32 %v90, %v93
    %vm95 = vweird.f32 %v89
    %vm96 = vweird.f32 %v90
    %vm97 = vmor %vm95, %vm96
    %v98 = vsel %vm97, %v90, %v94
    %v99 = vand.u32 2147483647, %v89
    %vm100 = vcmp.eq.f32.partialorder %v99, 8.507059e+37
    %v101 = vand.u32 %v89, 2147483648
    %v102 = vor.u32 1.1754944e-38, %v101
    %v103 = vsel %vm100, %v102, %v98
    %v104 = vmul.f32 1.0, %v103
    %105 = vst [vmem:[#allocation7] sm:$0x1] %v104
    // Predicated region
    $region18: #{tpu_custom_call.1} parent=1 // pred_check
      _
    $region19: #{tpu_custom_call.1} parent=1 // pred_check_branch
      %107 = sbr.rel (0) target = $region21
    $region20: #{tpu_custom_call.1} parent=1 // pred_region
      %109 = vsyncadd [#allocation4], 0
      %s111 = sshll.u32 [#allocation7], 4
      %s112 = int_to_ptr.vmem [resolvable:$true] %s111
      %s113 = sshll.u32 %s2, 4
      %s114 = int_to_ptr.hbm [resolvable:$true] %s113
      %116 = dma.vmem_to_hbm [thread:$0]  %s112, 16, %s114, [#allocation4]
    $region21: #{tpu_custom_call.1} parent=1 // pred_fallthru
      _
    // Predicated region
    $region22: #{tpu_custom_call.1} parent=1 // pred_check
      _
    $region23: #{tpu_custom_call.1} parent=1 // pred_check_branch
      %118 = sbr.rel (0) target = $region25
    $region24: #{tpu_custom_call.1} parent=1 // pred_region
      %120 = dma.done [#allocation4], 16
    $region25: #{tpu_custom_call.1} parent=1 // pred_fallthru
      _
    %121 = vsyncpa [#allocation3], 1
    %122 = vsyncpa [#allocation6], 1
    %123 = vsyncpa [#allocation4], 1

</llo_original>
